<compile_context>
chip_gen: v6e
topology: v6e:2x2x1
jax: 0.10.0
libtpu: 0.0.40
codegen_flags: <defaults>
</compile_context>

<pallas_src>
import jax
import jax.numpy as jnp
from jax.experimental import pallas as pl
from jax.experimental.pallas import tpu as pltpu

# ----- synthetic "constants" module -----------------------------------------
N_PITCH_TOKENS = 16
N_DUR_TOKENS = 8
MAX_SIMU_TOKENS = 5          # c_tensor has MAX_SIMU_TOKENS rows, first dropped
N_EDGE_TYPES = 3
NUM_DISTS = 32               # GCN default num_dists (edge_attr feature size)
BN_EPS = 1e-5

FRONTEND_TILE = 128          # node rows per frontend grid step


def _full_spec(a):
    nd = a.ndim
    return pl.BlockSpec(a.shape, lambda i, _nd=nd: (0,) * _nd)


def _block_diag(w, reps):
    fin, fout = w.shape
    out = jnp.zeros((reps * fin, reps * fout), w.dtype)
    for j in range(reps):
        out = out.at[j * fin:(j + 1) * fin, j * fout:(j + 1) * fout].set(w)
    return out


# ----------------------------------------------------------------------------
# Kernel 1: fused embedding front-end (pitch/dur emb + BN + select + chord)
# ----------------------------------------------------------------------------
def _frontend_kernel(pitch_ref, dur_ref, drum_ref, pw_ref, pb_ref,
                     dw_ref, db_ref, cw_ref, cb_ref, o_ref):
    half_cols = pw_ref.shape[1] // 2                      # m1 * d/2
    # one K = m1*16 matmul covers all slots AND both drum / non-drum weights
    p = jnp.dot(pitch_ref[...], pw_ref[...],
                preferred_element_type=jnp.float32) + pb_ref[...]     # (tn, m1*d)
    is_dr = drum_ref[...] > 0.5                                       # (tn, 1)
    p_sel = jnp.where(is_dr, p[:, half_cols:], p[:, :half_cols])      # (tn, m1*d/2)
    du = jnp.dot(dur_ref[...], dw_ref[...],
                 preferred_element_type=jnp.float32) + db_ref[...]    # (tn, m1*d/2)
    # chord_w rows are pre-permuted host-side for this [pitch | dur] layout
    emb = jnp.concatenate([p_sel, du], axis=1)                        # (tn, m1*d)
    x = jnp.dot(emb, cw_ref[...], preferred_element_type=jnp.float32) + cb_ref[...]
    o_ref[...] = jnp.maximum(x, 0.0)


def frontend(pitch_slab, dur_slab, drum_col, pw, pb, dw, db, cw, cb, *, d, tn):
    n = pitch_slab.shape[0]
    assert n % tn == 0
    args = (pitch_slab, dur_slab, drum_col, pw, pb, dw, db, cw, cb)
    return pl.pallas_call(
        _frontend_kernel,
        grid=(n // tn,),
        in_specs=[
            pl.BlockSpec((tn, pitch_slab.shape[1]), lambda i: (i, 0)),
            pl.BlockSpec((tn, dur_slab.shape[1]), lambda i: (i, 0)),
            pl.BlockSpec((tn, 1), lambda i: (i, 0)),
            pl.BlockSpec(pw.shape, lambda i: (0, 0)),
            pl.BlockSpec(pb.shape, lambda i: (0, 0)),
            pl.BlockSpec(dw.shape, lambda i: (0, 0)),
            pl.BlockSpec(db.shape, lambda i: (0, 0)),
            pl.BlockSpec(cw.shape, lambda i: (0, 0)),
            pl.BlockSpec(cb.shape, lambda i: (0, 0)),
        ],
        out_specs=pl.BlockSpec((tn, d), lambda i: (i, 0)),
        out_shape=jax.ShapeDtypeStruct((n, d), jnp.float32),
        compiler_params=pltpu.CompilerParams(
            dimension_semantics=("parallel",)),
    )(*args)


# ----------------------------------------------------------------------------
# Kernel 2: all GCL layers fused (shared edge_nn, bf16 gather/scatter matmuls,
#           wide 3-in-1 relation scatter, K=128 batched output transform)
# ----------------------------------------------------------------------------
def _gcn_stack_kernel(x_ref, ea_ref, nnw_ref, nnb_ref, soh_ref, doh_ref,
                      rel_ref, invw_ref, bw_ref, bb_ref, o_ref):
    num_layers = bw_ref.shape[0]
    num_rel = rel_ref.shape[1]
    x = x_ref[...]                                                     # (N, d) f32
    # edge gate weights: shared across layers -> computed once
    ew = jnp.dot(ea_ref[...], nnw_ref[...],
                 preferred_element_type=jnp.float32) + nnb_ref[...]    # (E, d)
    soh = soh_ref[...]                         # (E, N) bf16 gather one-hot
    doh = doh_ref[...]                         # (N, E) bf16 scatter one-hot
    rel = rel_ref[...].astype(jnp.float32)     # (E, R) cast ONCE (hoisted)
    invw = invw_ref[...]                       # (N, R*d) f32 (1/deg per relation)
    for l in range(num_layers):
        xb = x.astype(jnp.bfloat16)
        # source gather: bf16 x bf16 MXU matmul, f32 accumulation
        xj = jnp.dot(soh, xb, preferred_element_type=jnp.float32)      # (E, d)
        msg = jnp.maximum(xj * ew, 0.0)                                 # (E, d)
        # relation routing on the VPU, then ONE wide scatter matmul (R*d lanes)
        msg_wide = jnp.concatenate(
            [msg * rel[:, r:r + 1] for r in range(num_rel)],
            axis=1).astype(jnp.bfloat16)                                # (E, R*d)
        hsum = jnp.dot(doh, msg_wide,
                       preferred_element_type=jnp.float32)              # (N, R*d)
        h_wide = hsum * invw                  # per-relation mean scaling (f32)
        # batched relation + root transform: K = (R+1)*d = 128
        hcat = jnp.concatenate([h_wide, x], axis=1)                     # (N, 128)
        out = jnp.dot(hcat, bw_ref[l],
                      preferred_element_type=jnp.float32) + bb_ref[l]   # (N, d)
        x = x + jnp.maximum(out, 0.0)         # GCN epilogue: residual + relu
    o_ref[...] = x


def gcn_stack(x, edge_attr, nn_w, nn_b, src_oh, dst_oh_t, rel_cols,
              inv_wide, big_w, big_b):
    n, d = x.shape
    e = edge_attr.shape[0]
    num_rel = rel_cols.shape[1]
    num_layers = big_w.shape[0]
    args = (x, edge_attr, nn_w, nn_b, src_oh, dst_oh_t, rel_cols,
            inv_wide, big_w, big_b)
    flops = (2 * e * edge_attr.shape[1] * d
             + num_layers * (2 * e * n * d
                             + 2 * n * e * num_rel * d
                             + 2 * n * (num_rel + 1) * d * d))
    bytes_accessed = int(sum(int(a.size) * a.dtype.itemsize for a in args)
                         + n * d * 4)
    vmem_limit = int(min(64 * 1024 * 1024,
                         max(32 * 1024 * 1024, 4 * bytes_accessed)))
    return pl.pallas_call(
        _gcn_stack_kernel,
        grid=(1,),
        in_specs=[_full_spec(a) for a in args],
        out_specs=pl.BlockSpec((n, d), lambda i: (0, 0)),
        out_shape=jax.ShapeDtypeStruct((n, d), jnp.float32),
        cost_estimate=pl.CostEstimate(flops=flops, transcendentals=0,
                                      bytes_accessed=bytes_accessed),
        compiler_params=pltpu.CompilerParams(
            dimension_semantics=("arbitrary",),
            vmem_limit_bytes=vmem_limit),
    )(*args)
# TODO(synk): for very large graphs (E*N beyond the dense-one-hot VMEM budget,
# earliest on v7x's 64 MiB) this should become an index-based formulation:
# scalar-prefetch src/dst/edge_type (PrefetchScalarGridSpec), stream E-chunks
# from HBM and scatter-add into an (N, R*d) VMEM accumulator, making the layer
# O(E*d) instead of O(E*N*d).  The dense MXU formulation is kept here for the
# small/medium-graph regime this module targets.
# TODO(synk): gcn_stack / attention run grid=(1,) -> single TensorCore; a v7x
# dual-TC split needs the index-gather rewrite first.


# ----------------------------------------------------------------------------
# Kernel 3: global attention pooling + bars Linear, fused
# ----------------------------------------------------------------------------
def _attn_bars_kernel(x_ref, seg_ref, bar_ref, g_ref, gw_ref, gb_ref,
                      bw_ref, bb_ref, o_ref):
    x = x_ref[...]                                          # (N, d) f32
    seg = seg_ref[...].astype(jnp.float32)                  # (N, S)  cast once
    bar = bar_ref[...].astype(jnp.float32)                  # (N, n_bars)
    goh = g_ref[...].astype(jnp.float32)                    # (G, N)
    n_bars = bar.shape[1]
    # gate linear (+ folded BN)
    gate = jnp.dot(x, gw_ref[...],
                   preferred_element_type=jnp.float32) + gb_ref[...]   # (N, 1)
    neg = jnp.float32(-1e30)
    seg_mask = seg > 0.5
    # segment softmax via VPU broadcast + lane/sublane reductions (no 1-lane MXU)
    masked = jnp.where(seg_mask, gate, neg)                 # (N, S)
    seg_max = jnp.max(masked, axis=0, keepdims=True)        # (1, S)
    node_max = jnp.max(jnp.where(seg_mask, seg_max, neg),
                       axis=1, keepdims=True)               # (N, 1)
    ex = jnp.exp(gate - node_max)                           # (N, 1)
    seg_sum = jnp.sum(seg * ex, axis=0, keepdims=True)      # (1, S)
    node_sum = jnp.sum(jnp.where(seg_mask, seg_sum, 0.0),
                       axis=1, keepdims=True)               # (N, 1)
    a = ex / (node_sum + 1e-16)                             # (N, 1)
    ax = a * x                                              # (N, d)
    # bar-routed wide weighted sum: pooled arrives directly as (G, n_bars*d)
    ax_wide = jnp.concatenate(
        [ax * bar[:, b:b + 1] for b in range(n_bars)], axis=1)          # (N, n_bars*d)
    pooled_wide = jnp.dot(goh, ax_wide,
                          preferred_element_type=jnp.float32)           # (G, n_bars*d)
    # bars encoder fused in the epilogue (128-lane K, no HBM round trip)
    o_ref[...] = (jnp.dot(pooled_wide, bw_ref[...],
                          preferred_element_type=jnp.float32) + bb_ref[...])


def attn_bars_pool(x, seg_oh, bar_oh, graph_oh, gate_w, gate_b, bars_w, bars_b):
    n, d = x.shape
    g = graph_oh.shape[0]
    args = (x, seg_oh, bar_oh, graph_oh, gate_w, gate_b, bars_w, bars_b)
    return pl.pallas_call(
        _attn_bars_kernel,
        grid=(1,),
        in_specs=[_full_spec(a) for a in args],
        out_specs=pl.BlockSpec((g, d), lambda i: (0, 0)),
        out_shape=jax.ShapeDtypeStruct((g, d), jnp.float32),
        compiler_params=pltpu.CompilerParams(
            dimension_semantics=("arbitrary",)),
    )(*args)


# ----------------------------------------------------------------------------
# Parameter init (deterministic, synthetic)
# ----------------------------------------------------------------------------
def _lin_init(key, fin, fout):
    k1, k2 = jax.random.split(key)
    w = jax.random.normal(k1, (fin, fout), jnp.float32) / jnp.sqrt(fin)
    b = 0.01 * jax.random.normal(k2, (fout,), jnp.float32)
    return w, b


def _bn_init(key, f):
    k1, k2, k3, k4 = jax.random.split(key, 4)
    gamma = 1.0 + 0.1 * jax.random.normal(k1, (f,), jnp.float32)
    beta = 0.1 * jax.random.normal(k2, (f,), jnp.float32)
    mean = 0.1 * jax.random.normal(k3, (f,), jnp.float32)
    var = 1.0 + 0.1 * jax.random.uniform(k4, (f,), jnp.float32)
    scale = gamma / jnp.sqrt(var + BN_EPS)
    shift = beta - mean * scale
    return scale, shift


def init_params(key, d, n_bars, gnn_n_layers):
    ks = iter(jax.random.split(key, 32))
    p = {}
    p["nd_pitch_w"], p["nd_pitch_b"] = _lin_init(next(ks), N_PITCH_TOKENS, d // 2)
    p["dr_pitch_w"], p["dr_pitch_b"] = _lin_init(next(ks), N_PITCH_TOKENS, d // 2)
    p["dur_w"], p["dur_b"] = _lin_init(next(ks), N_DUR_TOKENS, d // 2)
    p["bn_nd_scale"], p["bn_nd_shift"] = _bn_init(next(ks), d // 2)
    p["bn_dr_scale"], p["bn_dr_shift"] = _bn_init(next(ks), d // 2)
    p["bn_dur_scale"], p["bn_dur_shift"] = _bn_init(next(ks), d // 2)
    p["chord_w"], p["chord_b"] = _lin_init(next(ks), d * (MAX_SIMU_TOKENS - 1), d)
    p["edge_nn_w"], p["edge_nn_b"] = _lin_init(next(ks), NUM_DISTS, d)
    for l in range(gnn_n_layers):
        kw = jax.random.split(next(ks), N_EDGE_TYPES)
        p[f"rel_w_{l}"] = jnp.stack(
            [_lin_init(kw[r], d, d)[0] for r in range(N_EDGE_TYPES)])
        p[f"root_{l}"], p[f"bias_{l}"] = _lin_init(next(ks), d, d)
    p["gate_w"], p["gate_b"] = _lin_init(next(ks), d, 1)
    p["gate_bn_scale"], p["gate_bn_shift"] = _bn_init(next(ks), 1)
    p["bars_w"], p["bars_b"] = _lin_init(next(ks), n_bars * d, d)
    return p


# ----------------------------------------------------------------------------
# ContentEncoder forward (eval mode)
# ----------------------------------------------------------------------------
def content_encoder_forward(params, c_tensor, is_drum, bars, batch,
                            edge_index, edge_attrs, *, d, n_bars,
                            gnn_n_layers, num_graphs):
    n_nodes = c_tensor.shape[0]
    c = c_tensor[:, 1:, :]                       # drop first simultaneous token
    m1 = c.shape[1]                              # MAX_SIMU_TOKENS - 1
    half = d // 2

    pitch_slab = c[..., :N_PITCH_TOKENS].reshape(n_nodes, m1 * N_PITCH_TOKENS)
    dur_slab = c[..., N_PITCH_TOKENS:].reshape(n_nodes, m1 * N_DUR_TOKENS)
    drum_col = is_drum.astype(jnp.float32).reshape(n_nodes, 1)

    # Fold eval-mode BatchNorm affine into the linear weights (host-side).
    def fold(w, b, scale, shift):
        return w * scale[None, :], b * scale + shift

    nd_w, nd_b = fold(params["nd_pitch_w"], params["nd_pitch_b"],
                      params["bn_nd_scale"], params["bn_nd_shift"])
    dr_w, dr_b = fold(params["dr_pitch_w"], params["dr_pitch_b"],
                      params["bn_dr_scale"], params["bn_dr_shift"])
    du_w, du_b = fold(params["dur_w"], params["dur_b"],
                      params["bn_dur_scale"], params["bn_dur_shift"])

    # Block-diagonal per-slot weights: all m1 slots in 2 matmuls in-kernel.
    pw = jnp.concatenate([_block_diag(nd_w, m1), _block_diag(dr_w, m1)],
                         axis=1)                              # (m1*16, m1*d)
    pb = jnp.concatenate([jnp.tile(nd_b, m1),
                          jnp.tile(dr_b, m1)]).reshape(1, m1 * d)
    dw = _block_diag(du_w, m1)                                # (m1*8, m1*d/2)
    db = jnp.tile(du_b, m1).reshape(1, m1 * half)

    # Pre-permute chord rows to match the kernel's [all-pitch | all-dur] layout
    # (original layout is [pitch0, dur0, pitch1, dur1, ...]).
    pitch_rows = (jnp.arange(m1)[:, None] * d
                  + jnp.arange(half)[None, :]).reshape(-1)
    dur_rows = (jnp.arange(m1)[:, None] * d + half
                + jnp.arange(half)[None, :]).reshape(-1)
    perm = jnp.concatenate([pitch_rows, dur_rows])
    cw = params["chord_w"][perm, :]
    cb = params["chord_b"].reshape(1, d)

    # ---- fused embedding front-end -> x (N, d), tiled over padded node rows --
    tn = FRONTEND_TILE
    n_pad = ((n_nodes + tn - 1) // tn) * tn
    pad = n_pad - n_nodes
    if pad:
        pitch_slab = jnp.pad(pitch_slab, ((0, pad), (0, 0)))
        dur_slab = jnp.pad(dur_slab, ((0, pad), (0, 0)))
        drum_col = jnp.pad(drum_col, ((0, pad), (0, 0)))
    x = frontend(pitch_slab, dur_slab, drum_col, pw, pb, dw, db, cw, cb,
                 d=d, tn=tn)
    x = x[:n_nodes]          # drop pad rows before any graph op touches them

    # ---- graph structure -> one-hot gather/scatter operands (bf16, exact) ----
    edge_type = edge_attrs[:, 0].astype(jnp.int32)
    edge_attr = edge_attrs[:, 1:]
    src, dst = edge_index[0], edge_index[1]
    src_oh = jax.nn.one_hot(src, n_nodes, dtype=jnp.bfloat16)        # (E, N)
    dst_oh_t = jax.nn.one_hot(dst, n_nodes, dtype=jnp.bfloat16).T    # (N, E)
    rel_cols = jax.nn.one_hot(edge_type, N_EDGE_TYPES,
                              dtype=jnp.bfloat16)                    # (E, R)
    deg = jnp.zeros((n_nodes, N_EDGE_TYPES),
                    jnp.float32).at[dst, edge_type].add(1.0)          # (N, R)
    inv_deg = jnp.where(deg > 0, 1.0 / jnp.maximum(deg, 1.0), 0.0)
    inv_wide = jnp.repeat(inv_deg, d, axis=1)                         # (N, R*d)

    # Stack per-layer [W_0; W_1; W_2; root] -> one K=(R+1)*d matmul per layer.
    big_w = jnp.stack([
        jnp.concatenate([params[f"rel_w_{l}"][r] for r in range(N_EDGE_TYPES)]
                        + [params[f"root_{l}"]], axis=0)
        for l in range(gnn_n_layers)])                       # (L, (R+1)*d, d)
    big_b = jnp.stack([params[f"bias_{l}"].reshape(1, d)
                       for l in range(gnn_n_layers)])        # (L, 1, d)

    # ---- all GCL layers in one kernel ----------------------------------------
    x = gcn_stack(x, edge_attr, params["edge_nn_w"],
                  params["edge_nn_b"].reshape(1, d),
                  src_oh, dst_oh_t, rel_cols, inv_wide, big_w, big_b)

    # ---- attention pooling over distinct bars + bars encoder (fused) ---------
    distinct_bars = bars + n_bars * batch
    num_segments = num_graphs * n_bars
    seg_oh = jax.nn.one_hot(distinct_bars, num_segments,
                            dtype=jnp.bfloat16)                       # (N, S)
    bar_oh = jax.nn.one_hot(bars, n_bars, dtype=jnp.bfloat16)         # (N, n_bars)
    graph_oh = jax.nn.one_hot(batch, num_graphs, dtype=jnp.bfloat16).T  # (G, N)
    gw, gb = fold(params["gate_w"], params["gate_b"],
                  params["gate_bn_scale"], params["gate_bn_shift"])
    z_c = attn_bars_pool(x, seg_oh, bar_oh, graph_oh, gw, gb.reshape(1, 1),
                         params["bars_w"], params["bars_b"].reshape(1, d))
    return z_c


# ----------------------------------------------------------------------------
if __name__ == "__main__":
    key = jax.random.PRNGKey(0)
    d = 32
    n_bars = 4
    num_graphs = 2
    nodes_per_bar = 3
    gnn_n_layers = 2
    n_nodes = num_graphs * n_bars * nodes_per_bar      # 24
    n_edges = 48

    k_param, k_c, k_src, k_dst, k_et, k_ed = jax.random.split(key, 6)
    params = init_params(k_param, d, n_bars, gnn_n_layers)

    c_tensor = jax.random.uniform(
        k_c, (n_nodes, MAX_SIMU_TOKENS, N_PITCH_TOKENS + N_DUR_TOKENS),
        dtype=jnp.float32)
    is_drum = (jnp.arange(n_nodes) % 3) == 0
    bars = jnp.tile(jnp.repeat(jnp.arange(n_bars, dtype=jnp.int32),
                               nodes_per_bar), num_graphs)
    batch = jnp.repeat(jnp.arange(num_graphs, dtype=jnp.int32),
                       n_bars * nodes_per_bar)
    src = jax.random.randint(k_src, (n_edges,), 0, n_nodes, dtype=jnp.int32)
    dst = jax.random.randint(k_dst, (n_edges,), 0, n_nodes, dtype=jnp.int32)
    edge_index = jnp.stack([src, dst])
    edge_type = jax.random.randint(k_et, (n_edges,), 0, N_EDGE_TYPES,
                                   dtype=jnp.int32)
    edge_dists = jax.random.uniform(k_ed, (n_edges, NUM_DISTS),
                                    dtype=jnp.float32)
    edge_attrs = jnp.concatenate(
        [edge_type[:, None].astype(jnp.float32), edge_dists], axis=1)

    z_c = content_encoder_forward(
        params, c_tensor, is_drum, bars, batch, edge_index, edge_attrs,
        d=d, n_bars=n_bars, gnn_n_layers=gnn_n_layers, num_graphs=num_graphs)
    z_c = jax.block_until_ready(z_c)

    assert z_c.shape == (num_graphs, d), z_c.shape
    assert bool(jnp.all(jnp.isfinite(z_c)))
    # TODO(synk): training-mode dropout / BatchNorm batch statistics not
    # implemented (eval only); GCN's optional per-layer BatchNorm assumed off.
    print("KERNEL_OK")
</pallas_src>

<mosaic_0001>
module attributes {stable_mosaic.version = 11 : i64} {
  func.func @_frontend_kernel(%arg0: i32, %arg1: memref<128x64xf32, #tpu.memory_space<vmem>>, %arg2: memref<128x32xf32, #tpu.memory_space<vmem>>, %arg3: memref<128x1xf32, #tpu.memory_space<vmem>>, %arg4: memref<64x128xf32, #tpu.memory_space<vmem>>, %arg5: memref<1x128xf32, #tpu.memory_space<vmem>>, %arg6: memref<32x64xf32, #tpu.memory_space<vmem>>, %arg7: memref<1x64xf32, #tpu.memory_space<vmem>>, %arg8: memref<128x32xf32, #tpu.memory_space<vmem>>, %arg9: memref<1x32xf32, #tpu.memory_space<vmem>>, %arg10: memref<128x32xf32, #tpu.memory_space<vmem>>) attributes {dimension_semantics = [#tpu.dimension_semantics<parallel>], iteration_bounds = array<i64: 1>, scalar_prefetch = 0 : i64, scratch_operands = 0 : i64, tpu.core_type = #tpu.core_type<tc>, window_params = [{transform_indices = @transform_0, window_bounds = array<i64: 128, 64>}, {transform_indices = @transform_1, window_bounds = array<i64: 128, 32>}, {transform_indices = @transform_2, window_bounds = array<i64: 128, 1>}, {pipeline_mode = #tpu.pipeline_mode<synchronous>, transform_indices = @transform_3, window_bounds = array<i64: 64, 128>}, {pipeline_mode = #tpu.pipeline_mode<synchronous>, transform_indices = @transform_4, window_bounds = array<i64: 1, 128>}, {pipeline_mode = #tpu.pipeline_mode<synchronous>, transform_indices = @transform_5, window_bounds = array<i64: 32, 64>}, {pipeline_mode = #tpu.pipeline_mode<synchronous>, transform_indices = @transform_6, window_bounds = array<i64: 1, 64>}, {pipeline_mode = #tpu.pipeline_mode<synchronous>, transform_indices = @transform_7, window_bounds = array<i64: 128, 32>}, {pipeline_mode = #tpu.pipeline_mode<synchronous>, transform_indices = @transform_8, window_bounds = array<i64: 1, 32>}, {transform_indices = @transform_9, window_bounds = array<i64: 128, 32>}]} {
    %c0 = arith.constant 0 : index
    %c0_0 = arith.constant 0 : index
    %0 = vector.load %arg1[%c0, %c0_0] : memref<128x64xf32, #tpu.memory_space<vmem>>, vector<128x64xf32>
    %c0_1 = arith.constant 0 : index
    %c0_2 = arith.constant 0 : index
    %1 = vector.load %arg4[%c0_1, %c0_2] : memref<64x128xf32, #tpu.memory_space<vmem>>, vector<64x128xf32>
    %cst = arith.constant dense<0.000000e+00> : vector<128x128xf32>
    %2 = tpu.matmul %0, %1, %cst {dimension_numbers = #tpu.dot_dimension_numbers<[1], [0], [0], [1], [0, 0, 1, 1], [], []>} : vector<128x64xf32>, vector<64x128xf32>, vector<128x128xf32> -> vector<128x128xf32>
    %c0_3 = arith.constant 0 : index
    %c0_4 = arith.constant 0 : index
    %3 = vector.load %arg5[%c0_3, %c0_4] : memref<1x128xf32, #tpu.memory_space<vmem>>, vector<1x128xf32>
    %4 = vector.broadcast %3 : vector<1x128xf32> to vector<128x128xf32>
    %5 = arith.addf %2, %4 : vector<128x128xf32>
    %c0_5 = arith.constant 0 : index
    %c0_6 = arith.constant 0 : index
    %6 = vector.load %arg3[%c0_5, %c0_6] : memref<128x1xf32, #tpu.memory_space<vmem>>, vector<128x1xf32>
    %cst_7 = arith.constant 5.000000e-01 : f32
    %7 = vector.broadcast %cst_7 : f32 to vector<128x1xf32>
    %8 = arith.cmpf ogt, %6, %7 : vector<128x1xf32>
    %9 = vector.extract_strided_slice %5 {offsets = [0, 64], sizes = [128, 64], strides = [1, 1]} : vector<128x128xf32> to vector<128x64xf32>
    %10 = vector.extract_strided_slice %5 {offsets = [0, 0], sizes = [128, 64], strides = [1, 1]} : vector<128x128xf32> to vector<128x64xf32>
    %11 = vector.shape_cast %8 : vector<128x1xi1> to vector<128x1xi1>
    %12 = vector.broadcast %11 : vector<128x1xi1> to vector<128x64xi1>
    %13 = arith.select %12, %9, %10 : vector<128x64xi1>, vector<128x64xf32>
    %c0_8 = arith.constant 0 : index
    %c0_9 = arith.constant 0 : index
    %14 = vector.load %arg2[%c0_8, %c0_9] : memref<128x32xf32, #tpu.memory_space<vmem>>, vector<128x32xf32>
    %c0_10 = arith.constant 0 : index
    %c0_11 = arith.constant 0 : index
    %15 = vector.load %arg6[%c0_10, %c0_11] : memref<32x64xf32, #tpu.memory_space<vmem>>, vector<32x64xf32>
    %cst_12 = arith.constant dense<0.000000e+00> : vector<128x64xf32>
    %16 = tpu.matmul %14, %15, %cst_12 {dimension_numbers = #tpu.dot_dimension_numbers<[1], [0], [0], [1], [0, 0, 1, 1], [], []>} : vector<128x32xf32>, vector<32x64xf32>, vector<128x64xf32> -> vector<128x64xf32>
    %c0_13 = arith.constant 0 : index
    %c0_14 = arith.constant 0 : index
    %17 = vector.load %arg7[%c0_13, %c0_14] : memref<1x64xf32, #tpu.memory_space<vmem>>, vector<1x64xf32>
    %18 = vector.broadcast %17 : vector<1x64xf32> to vector<128x64xf32>
    %19 = arith.addf %16, %18 : vector<128x64xf32>
    %20 = tpu.concatenate %13, %19 in 1 : vector<128x64xf32>, vector<128x64xf32> -> vector<128x128xf32>
    %c0_15 = arith.constant 0 : index
    %c0_16 = arith.constant 0 : index
    %21 = vector.load %arg8[%c0_15, %c0_16] : memref<128x32xf32, #tpu.memory_space<vmem>>, vector<128x32xf32>
    %cst_17 = arith.constant dense<0.000000e+00> : vector<128x32xf32>
    %22 = tpu.matmul %20, %21, %cst_17 {dimension_numbers = #tpu.dot_dimension_numbers<[1], [0], [0], [1], [0, 0, 1, 1], [], []>} : vector<128x128xf32>, vector<128x32xf32>, vector<128x32xf32> -> vector<128x32xf32>
    %c0_18 = arith.constant 0 : index
    %c0_19 = arith.constant 0 : index
    %23 = vector.load %arg9[%c0_18, %c0_19] : memref<1x32xf32, #tpu.memory_space<vmem>>, vector<1x32xf32>
    %24 = vector.broadcast %23 : vector<1x32xf32> to vector<128x32xf32>
    %25 = arith.addf %22, %24 : vector<128x32xf32>
    %cst_20 = arith.constant 0.000000e+00 : f32
    %26 = vector.broadcast %cst_20 : f32 to vector<128x32xf32>
    %27 = arith.maximumf %25, %26 : vector<128x32xf32>
    %c0_21 = arith.constant 0 : index
    %c0_22 = arith.constant 0 : index
    %28 = vector.load %arg10[%c0_21, %c0_22] : memref<128x32xf32, #tpu.memory_space<vmem>>, vector<128x32xf32>
    tpu.vector_store %arg10[%c0_21, %c0_22], %27 {strides = array<i32>} : memref<128x32xf32, #tpu.memory_space<vmem>>, vector<128x32xf32>,
    return
  }
  func.func @transform_0(%arg0: i32) -> (i32, i32) {
    %c0_i32 = arith.constant 0 : i32
    %c0_i32_0 = arith.constant 0 : i32
    return %arg0, %c0_i32 : i32, i32
  }
  func.func @transform_1(%arg0: i32) -> (i32, i32) {
    %c0_i32 = arith.constant 0 : i32
    %c0_i32_0 = arith.constant 0 : i32
    return %arg0, %c0_i32 : i32, i32
  }
  func.func @transform_2(%arg0: i32) -> (i32, i32) {
    %c0_i32 = arith.constant 0 : i32
    %c0_i32_0 = arith.constant 0 : i32
    return %arg0, %c0_i32 : i32, i32
  }
  func.func @transform_3(%arg0: i32) -> (i32, i32) {
    %c0_i32 = arith.constant 0 : i32
    %c0_i32_0 = arith.constant 0 : i32
    %c0_i32_1 = arith.constant 0 : i32
    return %c0_i32, %c0_i32_0 : i32, i32
  }
  func.func @transform_4(%arg0: i32) -> (i32, i32) {
    %c0_i32 = arith.constant 0 : i32
    %c0_i32_0 = arith.constant 0 : i32
    %c0_i32_1 = arith.constant 0 : i32
    return %c0_i32, %c0_i32_0 : i32, i32
  }
  func.func @transform_5(%arg0: i32) -> (i32, i32) {
    %c0_i32 = arith.constant 0 : i32
    %c0_i32_0 = arith.constant 0 : i32
    %c0_i32_1 = arith.constant 0 : i32
    return %c0_i32, %c0_i32_0 : i32, i32
  }
  func.func @transform_6(%arg0: i32) -> (i32, i32) {
    %c0_i32 = arith.constant 0 : i32
    %c0_i32_0 = arith.constant 0 : i32
    %c0_i32_1 = arith.constant 0 : i32
    return %c0_i32, %c0_i32_0 : i32, i32
  }
  func.func @transform_7(%arg0: i32) -> (i32, i32) {
    %c0_i32 = arith.constant 0 : i32
    %c0_i32_0 = arith.constant 0 : i32
    %c0_i32_1 = arith.constant 0 : i32
    return %c0_i32, %c0_i32_0 : i32, i32
  }
  func.func @transform_8(%arg0: i32) -> (i32, i32) {
    %c0_i32 = arith.constant 0 : i32
    %c0_i32_0 = arith.constant 0 : i32
    %c0_i32_1 = arith.constant 0 : i32
    return %c0_i32, %c0_i32_0 : i32, i32
  }
  func.func @transform_9(%arg0: i32) -> (i32, i32) {
    %c0_i32 = arith.constant 0 : i32
    %c0_i32_0 = arith.constant 0 : i32
    return %arg0, %c0_i32 : i32, i32
  }
}

</mosaic_0001>

<llo_original>
// kernel: tpu_custom_call.1
$region0: #{tpu_custom_call.1}
  #allocation0 [shape = 'u32[]', space=smem, size = 0x4, offset = 0x4, fixed_abs, tag = 'smem constant byte address 0x4 - core index']
  #allocation1 [shape = 'u32[144,128]{1,0:T(1,128)}', space=vmem, size = 0x12000, scoped, tag = 'internal scratch']
  %s0 = inlined_call_operand.vmem [shape: f32[128,64], index: 0, kind: input, shape index: {}]
  %s1 = inlined_call_operand.vmem [shape: f32[128,32], index: 1, kind: input, shape index: {}]
  %s2 = inlined_call_operand.vmem [shape: f32[128,1], index: 2, kind: input, shape index: {}]
  %s3 = inlined_call_operand.vmem [shape: f32[64,128], index: 3, kind: input, shape index: {}]
  %s4 = inlined_call_operand.vmem [shape: f32[1,128], index: 4, kind: input, shape index: {}]
  %s5 = inlined_call_operand.vmem [shape: f32[32,64], index: 5, kind: input, shape index: {}]
  %s6 = inlined_call_operand.vmem [shape: f32[1,64], index: 6, kind: input, shape index: {}]
  %s7 = inlined_call_operand.vmem [shape: f32[128,32], index: 7, kind: input, shape index: {}]
  %s8 = inlined_call_operand.vmem [shape: f32[1,32], index: 8, kind: input, shape index: {}]
  %s9 = inlined_call_operand.vmem [shape: f32[128,32], index: 9, kind: output, shape index: {}]
  %s10 = sld [smem:[#allocation0]]
  $region46: #{tpu_custom_call.1} parent=0
    _
  %s12 = ssub.s32 1, %s10
  %s13 = scalar_select 0, %s12, %s10
  // Predicated region
  $region2: #{tpu_custom_call.1} parent=0 // pred_check
    _
  $region3: #{tpu_custom_call.1} parent=0 // pred_check_branch
    %15 = sbr.rel (0) target = $region5
  $region4: #{tpu_custom_call.1} parent=0 // pred_region
    _
  $region5: #{tpu_custom_call.1} parent=0 // pred_fallthru
    _
  // Predicated region
  $region6: #{tpu_custom_call.1} parent=0 // pred_check
    _
  $region7: #{tpu_custom_call.1} parent=0 // pred_check_branch
    %17 = sbr.rel (0) target = $region9
  $region8: #{tpu_custom_call.1} parent=0 // pred_region
    _
  $region9: #{tpu_custom_call.1} parent=0 // pred_fallthru
    _
  // Predicated region
  $region10: #{tpu_custom_call.1} parent=0 // pred_check
    _
  $region11: #{tpu_custom_call.1} parent=0 // pred_check_branch
    %19 = sbr.rel (0) target = $region13
  $region12: #{tpu_custom_call.1} parent=0 // pred_region
    _
  $region13: #{tpu_custom_call.1} parent=0 // pred_fallthru
    _
  // Predicated region
  $region14: #{tpu_custom_call.1} parent=0 // pred_check
    _
  $region15: #{tpu_custom_call.1} parent=0 // pred_check_branch
    %21 = sbr.rel (0) target = $region17
  $region16: #{tpu_custom_call.1} parent=0 // pred_region
    _
  $region17: #{tpu_custom_call.1} parent=0 // pred_fallthru
    _
  // Predicated region
  $region18: #{tpu_custom_call.1} parent=0 // pred_check
    _
  $region19: #{tpu_custom_call.1} parent=0 // pred_check_branch
    %23 = sbr.rel (0) target = $region21
  $region20: #{tpu_custom_call.1} parent=0 // pred_region
    _
  $region21: #{tpu_custom_call.1} parent=0 // pred_fallthru
    _
  // Predicated region
  $region22: #{tpu_custom_call.1} parent=0 // pred_check
    _
  $region23: #{tpu_custom_call.1} parent=0 // pred_check_branch
    %25 = sbr.rel (0) target = $region25
  $region24: #{tpu_custom_call.1} parent=0 // pred_region
    _
  $region25: #{tpu_custom_call.1} parent=0 // pred_fallthru
    _
  // Predicated region
  $region26: #{tpu_custom_call.1} parent=0 // pred_check
    _
  $region27: #{tpu_custom_call.1} parent=0 // pred_check_branch
    %27 = sbr.rel (0) target = $region29
  $region28: #{tpu_custom_call.1} parent=0 // pred_region
    _
  $region29: #{tpu_custom_call.1} parent=0 // pred_fallthru
    _
  // Predicated region
  $region30: #{tpu_custom_call.1} parent=0 // pred_check
    _
  $region31: #{tpu_custom_call.1} parent=0 // pred_check_branch
    %29 = sbr.rel (0) target = $region33
  $region32: #{tpu_custom_call.1} parent=0 // pred_region
    _
  $region33: #{tpu_custom_call.1} parent=0 // pred_fallthru
    _
  // Predicated region
  $region34: #{tpu_custom_call.1} parent=0 // pred_check
    _
  $region35: #{tpu_custom_call.1} parent=0 // pred_check_branch
    %31 = sbr.rel (0) target = $region37
  $region36: #{tpu_custom_call.1} parent=0 // pred_region
    _
  $region37: #{tpu_custom_call.1} parent=0 // pred_fallthru
    _
  %v32 = vld [vmem:[%s0] sm:$0xff]
  %v33 = vld [vmem:[%s0 + $0x8] sm:$0xff]
  %v34 = vld [vmem:[%s0 + $0x10] sm:$0xff]
  %v35 = vld [vmem:[%s0 + $0x18] sm:$0xff]
  %v36 = vld [vmem:[%s0 + $0x20] sm:$0xff]
  %v37 = vld [vmem:[%s0 + $0x28] sm:$0xff]
  %v38 = vld [vmem:[%s0 + $0x30] sm:$0xff]
  %v39 = vld [vmem:[%s0 + $0x38] sm:$0xff]
  %v40 = vld [vmem:[%s0 + $0x40] sm:$0xff]
  %v41 = vld [vmem:[%s0 + $0x48] sm:$0xff]
  %v42 = vld [vmem:[%s0 + $0x50] sm:$0xff]
  %v43 = vld [vmem:[%s0 + $0x58] sm:$0xff]
  %v44 = vld [vmem:[%s0 + $0x60] sm:$0xff]
  %v45 = vld [vmem:[%s0 + $0x68] sm:$0xff]
  %v46 = vld [vmem:[%s0 + $0x70] sm:$0xff]
  %v47 = vld [vmem:[%s0 + $0x78] sm:$0xff]
  %v48 = vld [vmem:[%s3] sm:$0xff]
  %v49 = vld [vmem:[%s3 + $0x8] sm:$0xff]
  %v50 = vld [vmem:[%s3 + $0x10] sm:$0xff]
  %v51 = vld [vmem:[%s3 + $0x18] sm:$0xff]
  %v52 = vld [vmem:[%s3 + $0x20] sm:$0xff]
  %v53 = vld [vmem:[%s3 + $0x28] sm:$0xff]
  %v54 = vld [vmem:[%s3 + $0x30] sm:$0xff]
  %v55 = vld [vmem:[%s3 + $0x38] sm:$0xff]
  %v56 = vld [vmem:[%s4] sm:$0x1]
  %v58 = vlaneseq
  %v59 = vshrl.u32 %v58, 7
  %v60 = vsub.s32 0, %v59
  %v61 = vrot.slane %v56, %v60
  %vm63 = vcmask 523264
  %v65 = vsel %vm63, %v32, 0
  %v68 = vsel %vm63, %v33, 0
  %v71 = vsel %vm63, %v34, 0
  %v74 = vsel %vm63, %v35, 0
  %v77 = vsel %vm63, %v36, 0
  %v80 = vsel %vm63, %v37, 0
  %v83 = vsel %vm63, %v38, 0
  %v86 = vsel %vm63, %v39, 0
  %v89 = vsel %vm63, %v40, 0
  %v92 = vsel %vm63, %v41, 0
  %v95 = vsel %vm63, %v42, 0
  %v98 = vsel %vm63, %v43, 0
  %v101 = vsel %vm63, %v44, 0
  %v104 = vsel %vm63, %v45, 0
  %v107 = vsel %vm63, %v46, 0
  %v110 = vsel %vm63, %v47, 0
  %112 = vmatprep.subr.mxu0 0.0
  %113 = vmatpush1.msra.mxu0 0.0
  %114 = vmatprep.subr.mxu0 0.0
  %115 = vmatpush1.msra.mxu0 0.0
  %116 = vmatprep.subr.mxu0 0.0
  %117 = vmatpush1.msra.mxu0 0.0
  %118 = vmatprep.subr.mxu0 0.0
  %119 = vmatpush1.msra.mxu0 0.0
  %120 = vmatprep.subr.mxu0 0.0
  %121 = vmatpush1.msra.mxu0 0.0
  %122 = vmatprep.subr.mxu0 0.0
  %123 = vmatpush1.msra.mxu0 0.0
  %124 = vmatprep.subr.mxu0 0.0
  %125 = vmatpush1.msra.mxu0 0.0
  %126 = vmatprep.subr.mxu0 0.0
  %127 = vmatpush1.msra.mxu0 0.0
  %128 = vmatprep.subr.mxu0 0.0
  %129 = vmatpush1.msra.mxu0 %v55
  %130 = vmatprep.subr.mxu0 0.0
  %131 = vmatpush1.msra.mxu0 %v54
  %132 = vmatprep.subr.mxu0 0.0
  %133 = vmatpush1.msra.mxu0 %v53
  %134 = vmatprep.subr.mxu0 0.0
  %135 = vmatpush1.msra.mxu0 %v52
  %136 = vmatprep.subr.mxu0 0.0
  %137 = vmatpush1.msra.mxu0 %v51
  %138 = vmatprep.subr.mxu0 0.0
  %139 = vmatpush1.msra.mxu0 %v50
  %140 = vmatprep.subr.mxu0 0.0
  %141 = vmatpush1.msra.mxu0 %v49
  %142 = vmatprep.subr.mxu0 0.0
  %143 = vmatpush1.msra.mxu0 %v48
  %144 = vmatprep.subr.mxu0 0.0
  %145 = vmatpush2.msra.mxu0 0.0
  %146 = vmatprep.subr.mxu0 0.0
  %147 = vmatpush2.msra.mxu0 0.0
  %148 = vmatprep.subr.mxu0 0.0
  %149 = vmatpush2.msra.mxu0 0.0
  %150 = vmatprep.subr.mxu0 0.0
  %151 = vmatpush2.msra.mxu0 0.0
  %152 = vmatprep.subr.mxu0 0.0
  %153 = vmatpush2.msra.mxu0 0.0
  %154 = vmatprep.subr.mxu0 0.0
  %155 = vmatpush2.msra.mxu0 0.0
  %156 = vmatprep.subr.mxu0 0.0
  %157 = vmatpush2.msra.mxu0 0.0
  %158 = vmatprep.subr.mxu0 0.0
  %159 = vmatpush2.msra.mxu0 0.0
  %160 = vmatprep.subr.mxu0 0.0
  %161 = vmatpush2.msra.mxu0 0.0
  %162 = vmatprep.subr.mxu0 0.0
  %163 = vmatpush2.msra.mxu0 0.0
  %164 = vmatprep.subr.mxu0 0.0
  %165 = vmatpush2.msra.mxu0 0.0
  %166 = vmatprep.subr.mxu0 0.0
  %167 = vmatpush2.msra.mxu0 0.0
  %168 = vmatprep.subr.mxu0 0.0
  %169 = vmatpush2.msra.mxu0 0.0
  %170 = vmatprep.subr.mxu0 0.0
  %171 = vmatpush2.msra.mxu0 0.0
  %172 = vmatprep.subr.mxu0 0.0
  %173 = vmatpush2.msra.mxu0 0.0
  %174 = vmatprep.subr.mxu0 0.0
  %175 = vmatpush2.msra.mxu0 0.0
  %176 = vmatprep.mubr.f32.mxu0 0.0
  %177 = vmatmul.mubr.f32.gmra.mxu0 %v65
  %v178 = vpop.f32.mrf.mxu0
  %v179 = vadd.f32 %v61, %v178
  %v180 = vpop.f32.mrf.mxu0
  %181 = vmatprep.mubr.f32.mxu0 0.0
  %182 = vmatmul.mubr.f32.gmra.mxu0 %v68
  %v183 = vpop.f32.mrf.mxu0
  %v184 = vadd.f32 %v61, %v183
  %v185 = vpop.f32.mrf.mxu0
  %186 = vmatprep.mubr.f32.mxu0 0.0
  %187 = vmatmul.mubr.f32.gmra.mxu0 %v71
  %v188 = vpop.f32.mrf.mxu0
  %v189 = vadd.f32 %v61, %v188
  %v190 = vpop.f32.mrf.mxu0
  %191 = vmatprep.mubr.f32.mxu0 0.0
  %192 = vmatmul.mubr.f32.gmra.mxu0 %v74
  %v193 = vpop.f32.mrf.mxu0
  %v194 = vadd.f32 %v61, %v193
  %v195 = vpop.f32.mrf.mxu0
  %196 = vmatprep.mubr.f32.mxu0 0.0
  %197 = vmatmul.mubr.f32.gmra.mxu0 %v77
  %v198 = vpop.f32.mrf.mxu0
  %v199 = vadd.f32 %v61, %v198
  %v200 = vpop.f32.mrf.mxu0
  %201 = vmatprep.mubr.f32.mxu0 0.0
  %202 = vmatmul.mubr.f32.gmra.mxu0 %v80
  %v203 = vpop.f32.mrf.mxu0
  %v204 = vadd.f32 %v61, %v203
  %v205 = vpop.f32.mrf.mxu0
  %206 = vmatprep.mubr.f32.mxu0 0.0
  %207 = vmatmul.mubr.f32.gmra.mxu0 %v83
  %v208 = vpop.f32.mrf.mxu0
  %v209 = vadd.f32 %v61, %v208
  %v210 = vpop.f32.mrf.mxu0
  %211 = vmatprep.mubr.f32.mxu0 0.0
  %212 = vmatmul.mubr.f32.gmra.mxu0 %v86
  %v213 = vpop.f32.mrf.mxu0
  %v214 = vadd.f32 %v61, %v213
  %v215 = vpop.f32.mrf.mxu0
  %216 = vmatprep.mubr.f32.mxu0 0.0
  %217 = vmatmul.mubr.f32.gmra.mxu0 %v89
  %v218 = vpop.f32.mrf.mxu0
  %v219 = vadd.f32 %v61, %v218
  %v220 = vpop.f32.mrf.mxu0
  %221 = vmatprep.mubr.f32.mxu0 0.0
  %222 = vmatmul.mubr.f32.gmra.mxu0 %v92
  %v223 = vpop.f32.mrf.mxu0
  %v224 = vadd.f32 %v61, %v223
  %v225 = vpop.f32.mrf.mxu0
  %226 = vmatprep.mubr.f32.mxu0 0.0
  %227 = vmatmul.mubr.f32.gmra.mxu0 %v95
  %v228 = vpop.f32.mrf.mxu0
  %v229 = vadd.f32 %v61, %v228
  %v230 = vpop.f32.mrf.mxu0
  %231 = vmatprep.mubr.f32.mxu0 0.0
  %232 = vmatmul.mubr.f32.gmra.mxu0 %v98
  %v233 = vpop.f32.mrf.mxu0
  %v234 = vadd.f32 %v61, %v233
  %v235 = vpop.f32.mrf.mxu0
  %236 = vmatprep.mubr.f32.mxu0 0.0
  %237 = vmatmul.mubr.f32.gmra.mxu0 %v101
  %v238 = vpop.f32.mrf.mxu0
  %v239 = vadd.f32 %v61, %v238
  %v240 = vpop.f32.mrf.mxu0
  %241 = vmatprep.mubr.f32.mxu0 0.0
  %242 = vmatmul.mubr.f32.gmra.mxu0 %v104
  %v243 = vpop.f32.mrf.mxu0
  %v244 = vadd.f32 %v61, %v243
  %v245 = vpop.f32.mrf.mxu0
  %246 = vmatprep.mubr.f32.mxu0 0.0
  %247 = vmatmul.mubr.f32.gmra.mxu0 %v107
  %v248 = vpop.f32.mrf.mxu0
  %v249 = vadd.f32 %v61, %v248
  %v250 = vpop.f32.mrf.mxu0
  %251 = vmatprep.mubr.f32.mxu0 0.0
  %252 = vmatmul.mubr.f32.gmra.mxu0 %v110
  %v253 = vpop.f32.mrf.mxu0
  %v254 = vadd.f32 %v61, %v253
  %v255 = vpop.f32.mrf.mxu0
  %256 = vdwg.mxu0
  %v257 = vld [vmem:[%s2] sm:$0xff]
  %v258 = vld [vmem:[%s2 + $0x8] sm:$0xff]
  %v259 = vld [vmem:[%s2 + $0x10] sm:$0xff]
  %v260 = vld [vmem:[%s2 + $0x18] sm:$0xff]
  %v261 = vld [vmem:[%s2 + $0x20] sm:$0xff]
  %v262 = vld [vmem:[%s2 + $0x28] sm:$0xff]
  %v263 = vld [vmem:[%s2 + $0x30] sm:$0xff]
  %v264 = vld [vmem:[%s2 + $0x38] sm:$0xff]
  %v265 = vld [vmem:[%s2 + $0x40] sm:$0xff]
  %v266 = vld [vmem:[%s2 + $0x48] sm:$0xff]
  %v267 = vld [vmem:[%s2 + $0x50] sm:$0xff]
  %v268 = vld [vmem:[%s2 + $0x58] sm:$0xff]
  %v269 = vld [vmem:[%s2 + $0x60] sm:$0xff]
  %v270 = vld [vmem:[%s2 + $0x68] sm:$0xff]
  %v271 = vld [vmem:[%s2 + $0x70] sm:$0xff]
  %v272 = vld [vmem:[%s2 + $0x78] sm:$0xff]
  %vm273 = vcmp.gt.f32.partialorder %v257, 0.5
  %vm274 = vcmp.gt.f32.partialorder %v258, 0.5
  %vm275 = vcmp.gt.f32.partialorder %v259, 0.5
  %vm276 = vcmp.gt.f32.partialorder %v260, 0.5
  %vm277 = vcmp.gt.f32.partialorder %v261, 0.5
  %vm278 = vcmp.gt.f32.partialorder %v262, 0.5
  %vm279 = vcmp.gt.f32.partialorder %v263, 0.5
  %vm280 = vcmp.gt.f32.partialorder %v264, 0.5
  %vm281 = vcmp.gt.f32.partialorder %v265, 0.5
  %vm282 = vcmp.gt.f32.partialorder %v266, 0.5
  %vm283 = vcmp.gt.f32.partialorder %v267, 0.5
  %vm284 = vcmp.gt.f32.partialorder %v268, 0.5
  %vm285 = vcmp.gt.f32.partialorder %v269, 0.5
  %vm286 = vcmp.gt.f32.partialorder %v270, 0.5
  %vm287 = vcmp.gt.f32.partialorder %v271, 0.5
  %vm288 = vcmp.gt.f32.partialorder %v272, 0.5
  %v289 = vsel %vm273, 1, 0
  %v290 = vsel %vm274, 1, 0
  %v291 = vsel %vm275, 1, 0
  %v292 = vsel %vm276, 1, 0
  %v293 = vsel %vm277, 1, 0
  %v294 = vsel %vm278, 1, 0
  %v295 = vsel %vm279, 1, 0
  %v296 = vsel %vm280, 1, 0
  %v297 = vsel %vm281, 1, 0
  %v298 = vsel %vm282, 1, 0
  %v299 = vsel %vm283, 1, 0
  %v300 = vsel %vm284, 1, 0
  %v301 = vsel %vm285, 1, 0
  %v302 = vsel %vm286, 1, 0
  %v303 = vsel %vm287, 1, 0
  %v304 = vsel %vm288, 1, 0
  %305 = vset.pattern.permute.xlu0 0
  %306 = vperm.xlu0 %305, %v289
  %v307 = vpop.permute.xlu0 %306
  %308 = vset.pattern.permute.xlu0 0
  %309 = vperm.xlu0 %308, %v290
  %v310 = vpop.permute.xlu0 %309
  %311 = vset.pattern.permute.xlu0 0
  %312 = vperm.xlu0 %311, %v291
  %v313 = vpop.permute.xlu0 %312
  %314 = vset.pattern.permute.xlu0 0
  %315 = vperm.xlu0 %314, %v292
  %v316 = vpop.permute.xlu0 %315
  %317 = vset.pattern.permute.xlu0 0
  %318 = vperm.xlu0 %317, %v293
  %v319 = vpop.permute.xlu0 %318
  %320 = vset.pattern.permute.xlu0 0
  %321 = vperm.xlu0 %320, %v294
  %v322 = vpop.permute.xlu0 %321
  %323 = vset.pattern.permute.xlu0 0
  %324 = vperm.xlu0 %323, %v295
  %v325 = vpop.permute.xlu0 %324
  %326 = vset.pattern.permute.xlu0 0
  %327 = vperm.xlu0 %326, %v296
  %v328 = vpop.permute.xlu0 %327
  %329 = vset.pattern.permute.xlu0 0
  %330 = vperm.xlu0 %329, %v297
  %v331 = vpop.permute.xlu0 %330
  %332 = vset.pattern.permute.xlu0 0
  %333 = vperm.xlu0 %332, %v298
  %v334 = vpop.permute.xlu0 %333
  %335 = vset.pattern.permute.xlu0 0
  %336 = vperm.xlu0 %335, %v299
  %v337 = vpop.permute.xlu0 %336
  %338 = vset.pattern.permute.xlu0 0
  %339 = vperm.xlu0 %338, %v300
  %v340 = vpop.permute.xlu0 %339
  %341 = vset.pattern.permute.xlu0 0
  %342 = vperm.xlu0 %341, %v301
  %v343 = vpop.permute.xlu0 %342
  %344 = vset.pattern.permute.xlu0 0
  %345 = vperm.xlu0 %344, %v302
  %v346 = vpop.permute.xlu0 %345
  %347 = vset.pattern.permute.xlu0 0
  %348 = vperm.xlu0 %347, %v303
  %v349 = vpop.permute.xlu0 %348
  %350 = vset.pattern.permute.xlu0 0
  %351 = vperm.xlu0 %350, %v304
  %v352 = vpop.permute.xlu0 %351
  %vm353 = vcmp.eq.s32.totalorder %v307, 1
  %vm354 = vcmp.eq.s32.totalorder %v310, 1
  %vm355 = vcmp.eq.s32.totalorder %v313, 1
  %vm356 = vcmp.eq.s32.totalorder %v316, 1
  %vm357 = vcmp.eq.s32.totalorder %v319, 1
  %vm358 = vcmp.eq.s32.totalorder %v322, 1
  %vm359 = vcmp.eq.s32.totalorder %v325, 1
  %vm360 = vcmp.eq.s32.totalorder %v328, 1
  %vm361 = vcmp.eq.s32.totalorder %v331, 1
  %vm362 = vcmp.eq.s32.totalorder %v334, 1
  %vm363 = vcmp.eq.s32.totalorder %v337, 1
  %vm364 = vcmp.eq.s32.totalorder %v340, 1
  %vm365 = vcmp.eq.s32.totalorder %v343, 1
  %vm366 = vcmp.eq.s32.totalorder %v346, 1
  %vm367 = vcmp.eq.s32.totalorder %v349, 1
  %vm368 = vcmp.eq.s32.totalorder %v352, 1
  %385 = vrot.lane.b32.xlu0 %v179, 64
  %v386 = vpop.permute.xlu0 %385
  %387 = vrot.lane.b32.xlu0 %v184, 64
  %v388 = vpop.permute.xlu0 %387
  %389 = vrot.lane.b32.xlu0 %v189, 64
  %v390 = vpop.permute.xlu0 %389
  %391 = vrot.lane.b32.xlu0 %v194, 64
  %v392 = vpop.permute.xlu0 %391
  %393 = vrot.lane.b32.xlu0 %v199, 64
  %v394 = vpop.permute.xlu0 %393
  %395 = vrot.lane.b32.xlu0 %v204, 64
  %v396 = vpop.permute.xlu0 %395
  %397 = vrot.lane.b32.xlu0 %v209, 64
  %v398 = vpop.permute.xlu0 %397
  %399 = vrot.lane.b32.xlu0 %v214, 64
  %v400 = vpop.permute.xlu0 %399
  %401 = vrot.lane.b32.xlu0 %v219, 64
  %v402 = vpop.permute.xlu0 %401
  %403 = vrot.lane.b32.xlu0 %v224, 64
  %v404 = vpop.permute.xlu0 %403
  %405 = vrot.lane.b32.xlu0 %v229, 64
  %v406 = vpop.permute.xlu0 %405
  %407 = vrot.lane.b32.xlu0 %v234, 64
  %v408 = vpop.permute.xlu0 %407
  %409 = vrot.lane.b32.xlu0 %v239, 64
  %v410 = vpop.permute.xlu0 %409
  %411 = vrot.lane.b32.xlu0 %v244, 64
  %v412 = vpop.permute.xlu0 %411
  %413 = vrot.lane.b32.xlu0 %v249, 64
  %v414 = vpop.permute.xlu0 %413
  %415 = vrot.lane.b32.xlu0 %v254, 64
  %v416 = vpop.permute.xlu0 %415
  %v433 = vsel %vm353, %v179, %v386
  %v434 = vsel %vm354, %v184, %v388
  %v435 = vsel %vm355, %v189, %v390
  %v436 = vsel %vm356, %v194, %v392
  %v437 = vsel %vm357, %v199, %v394
  %v438 = vsel %vm358, %v204, %v396
  %v439 = vsel %vm359, %v209, %v398
  %v440 = vsel %vm360, %v214, %v400
  %v441 = vsel %vm361, %v219, %v402
  %v442 = vsel %vm362, %v224, %v404
  %v443 = vsel %vm363, %v229, %v406
  %v444 = vsel %vm364, %v234, %v408
  %v445 = vsel %vm365, %v239, %v410
  %v446 = vsel %vm366, %v244, %v412
  %v447 = vsel %vm367, %v249, %v414
  %v448 = vsel %vm368, %v254, %v416
  %v449 = vld [vmem:[%s1] sm:$0xff]
  %v450 = vld [vmem:[%s1 + $0x8] sm:$0xff]
  %v451 = vld [vmem:[%s1 + $0x10] sm:$0xff]
  %v452 = vld [vmem:[%s1 + $0x18] sm:$0xff]
  %v453 = vld [vmem:[%s1 + $0x20] sm:$0xff]
  %v454 = vld [vmem:[%s1 + $0x28] sm:$0xff]
  %v455 = vld [vmem:[%s1 + $0x30] sm:$0xff]
  %v456 = vld [vmem:[%s1 + $0x38] sm:$0xff]
  %v457 = vld [vmem:[%s1 + $0x40] sm:$0xff]
  %v458 = vld [vmem:[%s1 + $0x48] sm:$0xff]
  %v459 = vld [vmem:[%s1 + $0x50] sm:$0xff]
  %v460 = vld [vmem:[%s1 + $0x58] sm:$0xff]
  %v461 = vld [vmem:[%s1 + $0x60] sm:$0xff]
  %v462 = vld [vmem:[%s1 + $0x68] sm:$0xff]
  %v463 = vld [vmem:[%s1 + $0x70] sm:$0xff]
  %v464 = vld [vmem:[%s1 + $0x78] sm:$0xff]
  %v465 = vld [vmem:[%s5] sm:$0xff]
  %v466 = vld [vmem:[%s5 + $0x8] sm:$0xff]
  %v467 = vld [vmem:[%s5 + $0x10] sm:$0xff]
  %v468 = vld [vmem:[%s5 + $0x18] sm:$0xff]
  %v469 = vld [vmem:[%s6] sm:$0x1]
  %v471 = vlaneseq
  %v472 = vshrl.u32 %v471, 7
  %v473 = vsub.s32 0, %v472
  %v474 = vrot.slane %v469, %v473
  %vm476 = vcmask 261120
  %v478 = vsel %vm476, %v449, 0
  %v481 = vsel %vm476, %v450, 0
  %v484 = vsel %vm476, %v451, 0
  %v487 = vsel %vm476, %v452, 0
  %v490 = vsel %vm476, %v453, 0
  %v493 = vsel %vm476, %v454, 0
  %v496 = vsel %vm476, %v455, 0
  %v499 = vsel %vm476, %v456, 0
  %v502 = vsel %vm476, %v457, 0
  %v505 = vsel %vm476, %v458, 0
  %v508 = vsel %vm476, %v459, 0
  %v511 = vsel %vm476, %v460, 0
  %v514 = vsel %vm476, %v461, 0
  %v517 = vsel %vm476, %v462, 0
  %v520 = vsel %vm476, %v463, 0
  %v523 = vsel %vm476, %v464, 0
  %525 = vmatprep.subr.mxu0 0.0
  %526 = vmatpush1.msra.mxu0 0.0
  %527 = vmatprep.subr.mxu0 0.0
  %528 = vmatpush1.msra.mxu0 0.0
  %529 = vmatprep.subr.mxu0 0.0
  %530 = vmatpush1.msra.mxu0 0.0
  %531 = vmatprep.subr.mxu0 0.0
  %532 = vmatpush1.msra.mxu0 0.0
  %533 = vmatprep.subr.mxu0 0.0
  %534 = vmatpush1.msra.mxu0 0.0
  %535 = vmatprep.subr.mxu0 0.0
  %536 = vmatpush1.msra.mxu0 0.0
  %537 = vmatprep.subr.mxu0 0.0
  %538 = vmatpush1.msra.mxu0 0.0
  %539 = vmatprep.subr.mxu0 0.0
  %540 = vmatpush1.msra.mxu0 0.0
  %541 = vmatprep.subr.mxu0 0.0
  %542 = vmatpush1.msra.mxu0 0.0
  %543 = vmatprep.subr.mxu0 0.0
  %544 = vmatpush1.msra.mxu0 0.0
  %545 = vmatprep.subr.mxu0 0.0
  %546 = vmatpush1.msra.mxu0 0.0
  %547 = vmatprep.subr.mxu0 0.0
  %548 = vmatpush1.msra.mxu0 0.0
  %549 = vmatprep.subr.mxu0 0.0
  %550 = vmatpush1.msra.mxu0 %v468
  %551 = vmatprep.subr.mxu0 0.0
  %552 = vmatpush1.msra.mxu0 %v467
  %553 = vmatprep.subr.mxu0 0.0
  %554 = vmatpush1.msra.mxu0 %v466
  %555 = vmatprep.subr.mxu0 0.0
  %556 = vmatpush1.msra.mxu0 %v465
  %557 = vmatprep.subr.mxu0 0.0
  %558 = vmatpush2.msra.mxu0 0.0
  %559 = vmatprep.subr.mxu0 0.0
  %560 = vmatpush2.msra.mxu0 0.0
  %561 = vmatprep.subr.mxu0 0.0
  %562 = vmatpush2.msra.mxu0 0.0
  %563 = vmatprep.subr.mxu0 0.0
  %564 = vmatpush2.msra.mxu0 0.0
  %565 = vmatprep.subr.mxu0 0.0
  %566 = vmatpush2.msra.mxu0 0.0
  %567 = vmatprep.subr.mxu0 0.0
  %568 = vmatpush2.msra.mxu0 0.0
  %569 = vmatprep.subr.mxu0 0.0
  %570 = vmatpush2.msra.mxu0 0.0
  %571 = vmatprep.subr.mxu0 0.0
  %572 = vmatpush2.msra.mxu0 0.0
  %573 = vmatprep.subr.mxu0 0.0
  %574 = vmatpush2.msra.mxu0 0.0
  %575 = vmatprep.subr.mxu0 0.0
  %576 = vmatpush2.msra.mxu0 0.0
  %577 = vmatprep.subr.mxu0 0.0
  %578 = vmatpush2.msra.mxu0 0.0
  %579 = vmatprep.subr.mxu0 0.0
  %580 = vmatpush2.msra.mxu0 0.0
  %581 = vmatprep.subr.mxu0 0.0
  %582 = vmatpush2.msra.mxu0 0.0
  %583 = vmatprep.subr.mxu0 0.0
  %584 = vmatpush2.msra.mxu0 0.0
  %585 = vmatprep.subr.mxu0 0.0
  %586 = vmatpush2.msra.mxu0 0.0
  %587 = vmatprep.subr.mxu0 0.0
  %588 = vmatpush2.msra.mxu0 0.0
  %589 = vmatprep.mubr.f32.mxu0 0.0
  %590 = vmatmul.mubr.f32.gmra.mxu0 %v478
  %v591 = vpop.f32.mrf.mxu0
  %v592 = vadd.f32 %v474, %v591
  %v593 = vpop.f32.mrf.mxu0
  %594 = vmatprep.mubr.f32.mxu0 0.0
  %595 = vmatmul.mubr.f32.gmra.mxu0 %v481
  %v596 = vpop.f32.mrf.mxu0
  %v597 = vadd.f32 %v474, %v596
  %v598 = vpop.f32.mrf.mxu0
  %599 = vmatprep.mubr.f32.mxu0 0.0
  %600 = vmatmul.mubr.f32.gmra.mxu0 %v484
  %v601 = vpop.f32.mrf.mxu0
  %v602 = vadd.f32 %v474, %v601
  %v603 = vpop.f32.mrf.mxu0
  %604 = vmatprep.mubr.f32.mxu0 0.0
  %605 = vmatmul.mubr.f32.gmra.mxu0 %v487
  %v606 = vpop.f32.mrf.mxu0
  %v607 = vadd.f32 %v474, %v606
  %v608 = vpop.f32.mrf.mxu0
  %609 = vmatprep.mubr.f32.mxu0 0.0
  %610 = vmatmul.mubr.f32.gmra.mxu0 %v490
  %v611 = vpop.f32.mrf.mxu0
  %v612 = vadd.f32 %v474, %v611
  %v613 = vpop.f32.mrf.mxu0
  %614 = vmatprep.mubr.f32.mxu0 0.0
  %615 = vmatmul.mubr.f32.gmra.mxu0 %v493
  %v616 = vpop.f32.mrf.mxu0
  %v617 = vadd.f32 %v474, %v616
  %v618 = vpop.f32.mrf.mxu0
  %619 = vmatprep.mubr.f32.mxu0 0.0
  %620 = vmatmul.mubr.f32.gmra.mxu0 %v496
  %v621 = vpop.f32.mrf.mxu0
  %v622 = vadd.f32 %v474, %v621
  %v623 = vpop.f32.mrf.mxu0
  %624 = vmatprep.mubr.f32.mxu0 0.0
  %625 = vmatmul.mubr.f32.gmra.mxu0 %v499
  %v626 = vpop.f32.mrf.mxu0
  %v627 = vadd.f32 %v474, %v626
  %v628 = vpop.f32.mrf.mxu0
  %629 = vmatprep.mubr.f32.mxu0 0.0
  %630 = vmatmul.mubr.f32.gmra.mxu0 %v502
  %v631 = vpop.f32.mrf.mxu0
  %v632 = vadd.f32 %v474, %v631
  %v633 = vpop.f32.mrf.mxu0
  %634 = vmatprep.mubr.f32.mxu0 0.0
  %635 = vmatmul.mubr.f32.gmra.mxu0 %v505
  %v636 = vpop.f32.mrf.mxu0
  %v637 = vadd.f32 %v474, %v636
  %v638 = vpop.f32.mrf.mxu0
  %639 = vmatprep.mubr.f32.mxu0 0.0
  %640 = vmatmul.mubr.f32.gmra.mxu0 %v508
  %v641 = vpop.f32.mrf.mxu0
  %v642 = vadd.f32 %v474, %v641
  %v643 = vpop.f32.mrf.mxu0
  %644 = vmatprep.mubr.f32.mxu0 0.0
  %645 = vmatmul.mubr.f32.gmra.mxu0 %v511
  %v646 = vpop.f32.mrf.mxu0
  %v647 = vadd.f32 %v474, %v646
  %v648 = vpop.f32.mrf.mxu0
  %649 = vmatprep.mubr.f32.mxu0 0.0
  %650 = vmatmul.mubr.f32.gmra.mxu0 %v514
  %v651 = vpop.f32.mrf.mxu0
  %v652 = vadd.f32 %v474, %v651
  %v653 = vpop.f32.mrf.mxu0
  %654 = vmatprep.mubr.f32.mxu0 0.0
  %655 = vmatmul.mubr.f32.gmra.mxu0 %v517
  %v656 = vpop.f32.mrf.mxu0
  %v657 = vadd.f32 %v474, %v656
  %v658 = vpop.f32.mrf.mxu0
  %659 = vmatprep.mubr.f32.mxu0 0.0
  %660 = vmatmul.mubr.f32.gmra.mxu0 %v520
  %v661 = vpop.f32.mrf.mxu0
  %v662 = vadd.f32 %v474, %v661
  %v663 = vpop.f32.mrf.mxu0
  %664 = vmatprep.mubr.f32.mxu0 0.0
  %665 = vmatmul.mubr.f32.gmra.mxu0 %v523
  %v666 = vpop.f32.mrf.mxu0
  %v667 = vadd.f32 %v474, %v666
  %v668 = vpop.f32.mrf.mxu0
  %669 = vdwg.mxu0
  %686 = vrot.lane.b32.xlu0 %v433, 64
  %v687 = vpop.permute.xlu0 %686
  %688 = vrot.lane.b32.xlu0 %v434, 64
  %v689 = vpop.permute.xlu0 %688
  %690 = vrot.lane.b32.xlu0 %v435, 64
  %v691 = vpop.permute.xlu0 %690
  %692 = vrot.lane.b32.xlu0 %v436, 64
  %v693 = vpop.permute.xlu0 %692
  %694 = vrot.lane.b32.xlu0 %v437, 64
  %v695 = vpop.permute.xlu0 %694
  %696 = vrot.lane.b32.xlu0 %v438, 64
  %v697 = vpop.permute.xlu0 %696
  %698 = vrot.lane.b32.xlu0 %v439, 64
  %v699 = vpop.permute.xlu0 %698
  %700 = vrot.lane.b32.xlu0 %v440, 64
  %v701 = vpop.permute.xlu0 %700
  %702 = vrot.lane.b32.xlu0 %v441, 64
  %v703 = vpop.permute.xlu0 %702
  %704 = vrot.lane.b32.xlu0 %v442, 64
  %v705 = vpop.permute.xlu0 %704
  %706 = vrot.lane.b32.xlu0 %v443, 64
  %v707 = vpop.permute.xlu0 %706
  %708 = vrot.lane.b32.xlu0 %v444, 64
  %v709 = vpop.permute.xlu0 %708
  %710 = vrot.lane.b32.xlu0 %v445, 64
  %v711 = vpop.permute.xlu0 %710
  %712 = vrot.lane.b32.xlu0 %v446, 64
  %v713 = vpop.permute.xlu0 %712
  %714 = vrot.lane.b32.xlu0 %v447, 64
  %v715 = vpop.permute.xlu0 %714
  %716 = vrot.lane.b32.xlu0 %v448, 64
  %v717 = vpop.permute.xlu0 %716
  %750 = vrot.lane.b32.xlu0 %v592, 64
  %v751 = vpop.permute.xlu0 %750
  %752 = vrot.lane.b32.xlu0 %v597, 64
  %v753 = vpop.permute.xlu0 %752
  %754 = vrot.lane.b32.xlu0 %v602, 64
  %v755 = vpop.permute.xlu0 %754
  %756 = vrot.lane.b32.xlu0 %v607, 64
  %v757 = vpop.permute.xlu0 %756
  %758 = vrot.lane.b32.xlu0 %v612, 64
  %v759 = vpop.permute.xlu0 %758
  %760 = vrot.lane.b32.xlu0 %v617, 64
  %v761 = vpop.permute.xlu0 %760
  %762 = vrot.lane.b32.xlu0 %v622, 64
  %v763 = vpop.permute.xlu0 %762
  %764 = vrot.lane.b32.xlu0 %v627, 64
  %v765 = vpop.permute.xlu0 %764
  %766 = vrot.lane.b32.xlu0 %v632, 64
  %v767 = vpop.permute.xlu0 %766
  %768 = vrot.lane.b32.xlu0 %v637, 64
  %v769 = vpop.permute.xlu0 %768
  %770 = vrot.lane.b32.xlu0 %v642, 64
  %v771 = vpop.permute.xlu0 %770
  %772 = vrot.lane.b32.xlu0 %v647, 64
  %v773 = vpop.permute.xlu0 %772
  %774 = vrot.lane.b32.xlu0 %v652, 64
  %v775 = vpop.permute.xlu0 %774
  %776 = vrot.lane.b32.xlu0 %v657, 64
  %v777 = vpop.permute.xlu0 %776
  %778 = vrot.lane.b32.xlu0 %v662, 64
  %v779 = vpop.permute.xlu0 %778
  %780 = vrot.lane.b32.xlu0 %v667, 64
  %v781 = vpop.permute.xlu0 %780
  %v798 = vsel %vm63, %v687, %v751
  %v799 = vsel %vm63, %v689, %v753
  %v800 = vsel %vm63, %v691, %v755
  %v801 = vsel %vm63, %v693, %v757
  %v802 = vsel %vm63, %v695, %v759
  %v803 = vsel %vm63, %v697, %v761
  %v804 = vsel %vm63, %v699, %v763
  %v805 = vsel %vm63, %v701, %v765
  %v806 = vsel %vm63, %v703, %v767
  %v807 = vsel %vm63, %v705, %v769
  %v808 = vsel %vm63, %v707, %v771
  %v809 = vsel %vm63, %v709, %v773
  %v810 = vsel %vm63, %v711, %v775
  %v811 = vsel %vm63, %v713, %v777
  %v812 = vsel %vm63, %v715, %v779
  %v813 = vsel %vm63, %v717, %v781
  %v814 = vld [vmem:[%s7] sm:$0xff]
  %v815 = vld [vmem:[%s7 + $0x8] sm:$0xff]
  %v816 = vld [vmem:[%s7 + $0x10] sm:$0xff]
  %v817 = vld [vmem:[%s7 + $0x18] sm:$0xff]
  %v818 = vld [vmem:[%s7 + $0x20] sm:$0xff]
  %v819 = vld [vmem:[%s7 + $0x28] sm:$0xff]
  %v820 = vld [vmem:[%s7 + $0x30] sm:$0xff]
  %v821 = vld [vmem:[%s7 + $0x38] sm:$0xff]
  %v822 = vld [vmem:[%s7 + $0x40] sm:$0xff]
  %v823 = vld [vmem:[%s7 + $0x48] sm:$0xff]
  %v824 = vld [vmem:[%s7 + $0x50] sm:$0xff]
  %v825 = vld [vmem:[%s7 + $0x58] sm:$0xff]
  %v826 = vld [vmem:[%s7 + $0x60] sm:$0xff]
  %v827 = vld [vmem:[%s7 + $0x68] sm:$0xff]
  %v828 = vld [vmem:[%s7 + $0x70] sm:$0xff]
  %v829 = vld [vmem:[%s7 + $0x78] sm:$0xff]
  %v830 = vld [vmem:[%s8] sm:$0x1]
  %v832 = vlaneseq
  %v833 = vshrl.u32 %v832, 7
  %v834 = vsub.s32 0, %v833
  %v835 = vrot.slane %v830, %v834
  %837 = vmatprep.subr.mxu0 0.0
  %838 = vmatpush1.msra.mxu0 %v829
  %839 = vmatprep.subr.mxu0 0.0
  %840 = vmatpush1.msra.mxu0 %v828
  %841 = vmatprep.subr.mxu0 0.0
  %842 = vmatpush1.msra.mxu0 %v827
  %843 = vmatprep.subr.mxu0 0.0
  %844 = vmatpush1.msra.mxu0 %v826
  %845 = vmatprep.subr.mxu0 0.0
  %846 = vmatpush1.msra.mxu0 %v825
  %847 = vmatprep.subr.mxu0 0.0
  %848 = vmatpush1.msra.mxu0 %v824
  %849 = vmatprep.subr.mxu0 0.0
  %850 = vmatpush1.msra.mxu0 %v823
  %851 = vmatprep.subr.mxu0 0.0
  %852 = vmatpush1.msra.mxu0 %v822
  %853 = vmatprep.subr.mxu0 0.0
  %854 = vmatpush1.msra.mxu0 %v821
  %855 = vmatprep.subr.mxu0 0.0
  %856 = vmatpush1.msra.mxu0 %v820
  %857 = vmatprep.subr.mxu0 0.0
  %858 = vmatpush1.msra.mxu0 %v819
  %859 = vmatprep.subr.mxu0 0.0
  %860 = vmatpush1.msra.mxu0 %v818
  %861 = vmatprep.subr.mxu0 0.0
  %862 = vmatpush1.msra.mxu0 %v817
  %863 = vmatprep.subr.mxu0 0.0
  %864 = vmatpush1.msra.mxu0 %v816
  %865 = vmatprep.subr.mxu0 0.0
  %866 = vmatpush1.msra.mxu0 %v815
  %867 = vmatprep.subr.mxu0 0.0
  %868 = vmatpush1.msra.mxu0 %v814
  %869 = vmatprep.subr.mxu0 0.0
  %870 = vmatpush2.msra.mxu0 0.0
  %871 = vmatprep.subr.mxu0 0.0
  %872 = vmatpush2.msra.mxu0 0.0
  %873 = vmatprep.subr.mxu0 0.0
  %874 = vmatpush2.msra.mxu0 0.0
  %875 = vmatprep.subr.mxu0 0.0
  %876 = vmatpush2.msra.mxu0 0.0
  %877 = vmatprep.subr.mxu0 0.0
  %878 = vmatpush2.msra.mxu0 0.0
  %879 = vmatprep.subr.mxu0 0.0
  %880 = vmatpush2.msra.mxu0 0.0
  %881 = vmatprep.subr.mxu0 0.0
  %882 = vmatpush2.msra.mxu0 0.0
  %883 = vmatprep.subr.mxu0 0.0
  %884 = vmatpush2.msra.mxu0 0.0
  %885 = vmatprep.subr.mxu0 0.0
  %886 = vmatpush2.msra.mxu0 0.0
  %887 = vmatprep.subr.mxu0 0.0
  %888 = vmatpush2.msra.mxu0 0.0
  %889 = vmatprep.subr.mxu0 0.0
  %890 = vmatpush2.msra.mxu0 0.0
  %891 = vmatprep.subr.mxu0 0.0
  %892 = vmatpush2.msra.mxu0 0.0
  %893 = vmatprep.subr.mxu0 0.0
  %894 = vmatpush2.msra.mxu0 0.0
  %895 = vmatprep.subr.mxu0 0.0
  %896 = vmatpush2.msra.mxu0 0.0
  %897 = vmatprep.subr.mxu0 0.0
  %898 = vmatpush2.msra.mxu0 0.0
  %899 = vmatprep.subr.mxu0 0.0
  %900 = vmatpush2.msra.mxu0 0.0
  %901 = vmatprep.mubr.f32.mxu0 0.0
  %902 = vmatmul.mubr.f32.gmra.mxu0 %v798
  %v903 = vpop.f32.mrf.mxu0
  %v904 = vadd.f32 %v835, %v903
  %v905 = vpop.f32.mrf.mxu0
  %906 = vmatprep.mubr.f32.mxu0 0.0
  %907 = vmatmul.mubr.f32.gmra.mxu0 %v799
  %v908 = vpop.f32.mrf.mxu0
  %v909 = vadd.f32 %v835, %v908
  %v910 = vpop.f32.mrf.mxu0
  %911 = vmatprep.mubr.f32.mxu0 0.0
  %912 = vmatmul.mubr.f32.gmra.mxu0 %v800
  %v913 = vpop.f32.mrf.mxu0
  %v914 = vadd.f32 %v835, %v913
  %v915 = vpop.f32.mrf.mxu0
  %916 = vmatprep.mubr.f32.mxu0 0.0
  %917 = vmatmul.mubr.f32.gmra.mxu0 %v801
  %v918 = vpop.f32.mrf.mxu0
  %v919 = vadd.f32 %v835, %v918
  %v920 = vpop.f32.mrf.mxu0
  %921 = vmatprep.mubr.f32.mxu0 0.0
  %922 = vmatmul.mubr.f32.gmra.mxu0 %v802
  %v923 = vpop.f32.mrf.mxu0
  %v924 = vadd.f32 %v835, %v923
  %v925 = vpop.f32.mrf.mxu0
  %926 = vmatprep.mubr.f32.mxu0 0.0
  %927 = vmatmul.mubr.f32.gmra.mxu0 %v803
  %v928 = vpop.f32.mrf.mxu0
  %v929 = vadd.f32 %v835, %v928
  %v930 = vpop.f32.mrf.mxu0
  %931 = vmatprep.mubr.f32.mxu0 0.0
  %932 = vmatmul.mubr.f32.gmra.mxu0 %v804
  %v933 = vpop.f32.mrf.mxu0
  %v934 = vadd.f32 %v835, %v933
  %v935 = vpop.f32.mrf.mxu0
  %936 = vmatprep.mubr.f32.mxu0 0.0
  %937 = vmatmul.mubr.f32.gmra.mxu0 %v805
  %v938 = vpop.f32.mrf.mxu0
  %v939 = vadd.f32 %v835, %v938
  %v940 = vpop.f32.mrf.mxu0
  %941 = vmatprep.mubr.f32.mxu0 0.0
  %942 = vmatmul.mubr.f32.gmra.mxu0 %v806
  %v943 = vpop.f32.mrf.mxu0
  %v944 = vadd.f32 %v835, %v943
  %v945 = vpop.f32.mrf.mxu0
  %946 = vmatprep.mubr.f32.mxu0 0.0
  %947 = vmatmul.mubr.f32.gmra.mxu0 %v807
  %v948 = vpop.f32.mrf.mxu0
  %v949 = vadd.f32 %v835, %v948
  %v950 = vpop.f32.mrf.mxu0
  %951 = vmatprep.mubr.f32.mxu0 0.0
  %952 = vmatmul.mubr.f32.gmra.mxu0 %v808
  %v953 = vpop.f32.mrf.mxu0
  %v954 = vadd.f32 %v835, %v953
  %v955 = vpop.f32.mrf.mxu0
  %956 = vmatprep.mubr.f32.mxu0 0.0
  %957 = vmatmul.mubr.f32.gmra.mxu0 %v809
  %v958 = vpop.f32.mrf.mxu0
  %v959 = vadd.f32 %v835, %v958
  %v960 = vpop.f32.mrf.mxu0
  %961 = vmatprep.mubr.f32.mxu0 0.0
  %962 = vmatmul.mubr.f32.gmra.mxu0 %v810
  %v963 = vpop.f32.mrf.mxu0
  %v964 = vadd.f32 %v835, %v963
  %v965 = vpop.f32.mrf.mxu0
  %966 = vmatprep.mubr.f32.mxu0 0.0
  %967 = vmatmul.mubr.f32.gmra.mxu0 %v811
  %v968 = vpop.f32.mrf.mxu0
  %v969 = vadd.f32 %v835, %v968
  %v970 = vpop.f32.mrf.mxu0
  %971 = vmatprep.mubr.f32.mxu0 0.0
  %972 = vmatmul.mubr.f32.gmra.mxu0 %v812
  %v973 = vpop.f32.mrf.mxu0
  %v974 = vadd.f32 %v835, %v973
  %v975 = vpop.f32.mrf.mxu0
  %976 = vmatprep.mubr.f32.mxu0 0.0
  %977 = vmatmul.mubr.f32.gmra.mxu0 %v813
  %v978 = vpop.f32.mrf.mxu0
  %v979 = vadd.f32 %v835, %v978
  %v980 = vpop.f32.mrf.mxu0
  %981 = vdwg.mxu0
  %v982 = vmax.f32 %v904, 0.0
  %v983 = vmax.f32 %v909, 0.0
  %v984 = vmax.f32 %v914, 0.0
  %v985 = vmax.f32 %v919, 0.0
  %v986 = vmax.f32 %v924, 0.0
  %v987 = vmax.f32 %v929, 0.0
  %v988 = vmax.f32 %v934, 0.0
  %v989 = vmax.f32 %v939, 0.0
  %v990 = vmax.f32 %v944, 0.0
  %v991 = vmax.f32 %v949, 0.0
  %v992 = vmax.f32 %v954, 0.0
  %v993 = vmax.f32 %v959, 0.0
  %v994 = vmax.f32 %v964, 0.0
  %v995 = vmax.f32 %v969, 0.0
  %v996 = vmax.f32 %v974, 0.0
  %v997 = vmax.f32 %v979, 0.0
  %998 = vst.msk [vmem:[%s9] sm:$0xff] %vm476, %v982
  %999 = vst.msk [vmem:[%s9 + $0x8] sm:$0xff] %vm476, %v983
  %1000 = vst.msk [vmem:[%s9 + $0x10] sm:$0xff] %vm476, %v984
  %1001 = vst.msk [vmem:[%s9 + $0x18] sm:$0xff] %vm476, %v985
  %1002 = vst.msk [vmem:[%s9 + $0x20] sm:$0xff] %vm476, %v986
  %1003 = vst.msk [vmem:[%s9 + $0x28] sm:$0xff] %vm476, %v987
  %1004 = vst.msk [vmem:[%s9 + $0x30] sm:$0xff] %vm476, %v988
  %1005 = vst.msk [vmem:[%s9 + $0x38] sm:$0xff] %vm476, %v989
  %1006 = vst.msk [vmem:[%s9 + $0x40] sm:$0xff] %vm476, %v990
  %1007 = vst.msk [vmem:[%s9 + $0x48] sm:$0xff] %vm476, %v991
  %1008 = vst.msk [vmem:[%s9 + $0x50] sm:$0xff] %vm476, %v992
  %1009 = vst.msk [vmem:[%s9 + $0x58] sm:$0xff] %vm476, %v993
  %1010 = vst.msk [vmem:[%s9 + $0x60] sm:$0xff] %vm476, %v994
  %1011 = vst.msk [vmem:[%s9 + $0x68] sm:$0xff] %vm476, %v995
  %1012 = vst.msk [vmem:[%s9 + $0x70] sm:$0xff] %vm476, %v996
  %1013 = vst.msk [vmem:[%s9 + $0x78] sm:$0xff] %vm476, %v997
  // Predicated region
  $region38: #{tpu_custom_call.1} parent=0 // pred_check
    _
  $region39: #{tpu_custom_call.1} parent=0 // pred_check_branch
    %1015 = sbr.rel (0) target = $region41
  $region40: #{tpu_custom_call.1} parent=0 // pred_region
    _
  $region41: #{tpu_custom_call.1} parent=0 // pred_fallthru
    _
  // Predicated region
  $region42: #{tpu_custom_call.1} parent=0 // pred_check
    _
  $region43: #{tpu_custom_call.1} parent=0 // pred_check_branch
    %1017 = sbr.rel (0) target = $region45
  $region44: #{tpu_custom_call.1} parent=0 // pred_region
    _
  $region45: #{tpu_custom_call.1} parent=0 // pred_fallthru
    _

</llo_original>
